<compile_context>
chip_gen: v7x
topology: tpu7x:2x2x1
jax: 0.10.0
libtpu: 0.0.40
codegen_flags: <defaults>
</compile_context>

<pallas_src>
import functools

import jax
import jax.numpy as jnp
from jax import lax
from jax.experimental import pallas as pl
from jax.experimental.pallas import tpu as pltpu


def _round_up(x, m):
    return (x + m - 1) // m * m


def _mlp_kernel(x_ref, w1_ref, b1_ref, w2_ref, b2_ref, w3_ref, b3_ref, o_ref,
                *, bf16_epilogue):
    bf16 = jnp.bfloat16
    f32 = jnp.float32

    # Layer 1: contract x (TB, 16) on its last dim against w1 (320, 16) ->
    # (320, TB).  Batch lands on the lane axis; Mosaic folds the transposed
    # contraction into MXU operand staging (no explicit XLU relayout of x).
    h1 = lax.dot_general(
        w1_ref[...], x_ref[...].astype(bf16),
        dimension_numbers=(((1,), (1,)), ((), ())),
        preferred_element_type=f32)
    if bf16_epilogue:
        # v6e/v7x: bf16-native VPU -- cast once, bias+ReLU in bf16.
        h1 = jnp.maximum(h1.astype(bf16) + b1_ref[...].astype(bf16), 0.0)
    else:
        # v5e: f32 epilogue, downcast fused into the ReLU result.
        h1 = jnp.maximum(h1 + b1_ref[...], 0.0).astype(bf16)        # (320, TB)

    # Layer 2: (64, 320) @ (320, TB) -> bias -> ReLU.
    h2 = jnp.dot(w2_ref[...], h1, preferred_element_type=f32)
    if bf16_epilogue:
        h2 = jnp.maximum(h2.astype(bf16) + b2_ref[...].astype(bf16), 0.0)
    else:
        h2 = jnp.maximum(h2 + b2_ref[...], 0.0)                      # (64, TB)

    # Layer 3 (out_features = 1): VPU multiply + sublane (XLU) reduce instead
    # of an M=1 MXU matmul.  f32 accumulate.
    z = jnp.sum(w3_ref[...] * h2.astype(f32), axis=0, keepdims=True)
    z = z + b3_ref[0, 0]                                             # (1, TB)

    # Sigmoid = exp + reciprocal, both on the EUP slot.
    o_ref[...] = pl.reciprocal(1.0 + jnp.exp(-z), approx=True)


def prepare_params(w1, b1, w2, b2, w3, b3):
    """One-time parameter prep (hoisted out of the per-call forward).

    PyTorch nn.Linear layout: w_i is (out_features, in_features).
    Returns bf16 MXU weights, f32 column biases, w3 as an f32 column vector
    (used by the VPU reduce), and b3 as a (1, 1) SMEM scalar.
    """
    return (
        w1.astype(jnp.bfloat16),                      # (320, 16)
        b1.reshape(-1, 1).astype(jnp.float32),        # (320, 1)
        w2.astype(jnp.bfloat16),                      # (64, 320)
        b2.reshape(-1, 1).astype(jnp.float32),        # (64, 1)
        w3.reshape(-1, 1).astype(jnp.float32),        # (64, 1)
        b3.reshape(1, 1).astype(jnp.float32),         # (1, 1)
    )


@functools.partial(jax.jit,
                   static_argnames=("block_b", "bf16_epilogue", "min_tiles"))
def simple_model_forward(x, w1b, b1c, w2b, b2c, w3c, b3s, *,
                         block_b=1024, bf16_epilogue=False, min_tiles=1):
    """Fused forward pass.  x: (B, 16) f32 -> (B, 1) f32."""
    B, d_in = x.shape

    # Batch tile: single tile for small B, otherwise block_b (multiple of 128).
    # On v7x (min_tiles=2) large single-tile batches are split so the
    # "parallel" grid axis covers both TensorCores.
    if B <= block_b:
        tb = _round_up(B, 8)
        if min_tiles > 1 and B >= 256:
            tb = _round_up(pl.cdiv(B, min_tiles), 128)
    else:
        assert block_b % 128 == 0, "block_b must be a multiple of 128"
        tb = block_b
    b_pad = _round_up(B, tb)
    grid = b_pad // tb

    if b_pad != B:
        x = jnp.pad(x, ((0, b_pad - B), (0, 0)))

    resident = lambda shape: pl.BlockSpec(shape, lambda i: (0, 0))

    out_t = pl.pallas_call(
        functools.partial(_mlp_kernel, bf16_epilogue=bf16_epilogue),
        out_shape=jax.ShapeDtypeStruct((1, b_pad), jnp.float32),
        grid_spec=pltpu.PrefetchScalarGridSpec(
            num_scalar_prefetch=0,
            grid=(grid,),
            in_specs=[
                pl.BlockSpec((tb, d_in), lambda i: (i, 0)),          # x tile
                resident(w1b.shape), resident(b1c.shape),            # layer 1
                resident(w2b.shape), resident(b2c.shape),            # layer 2
                resident(w3c.shape),                                 # layer 3 w
                pl.BlockSpec(memory_space=pltpu.MemorySpace.SMEM),   # b3 scalar
            ],
            out_specs=pl.BlockSpec((1, tb), lambda i: (0, i)),       # lane-dense
        ),
        compiler_params=pltpu.CompilerParams(
            dimension_semantics=("parallel",)),
    )(x, w1b, b1c, w2b, b2c, w3c, b3s)

    # (1, b_pad) lane-dense -> (B, 1)
    return out_t[0, :B].reshape(B, 1)


def _init_linear(key, fan_in, fan_out):
    # PyTorch nn.Linear default init: U(-1/sqrt(fan_in), 1/sqrt(fan_in)).
    kw, kb = jax.random.split(key)
    bound = 1.0 / (fan_in ** 0.5)
    w = jax.random.uniform(kw, (fan_out, fan_in), jnp.float32, -bound, bound)
    b = jax.random.uniform(kb, (fan_out,), jnp.float32, -bound, bound)
    return w, b


if __name__ == "__main__":
    key = jax.random.PRNGKey(0)
    kx, k1, k2, k3 = jax.random.split(key, 4)

    w1, b1 = _init_linear(k1, 16, 320)
    w2, b2 = _init_linear(k2, 320, 64)
    w3, b3 = _init_linear(k3, 64, 1)
    params = prepare_params(w1, b1, w2, b2, w3, b3)   # hoisted: casts run once

    # Generation-specific knobs (safe fallbacks if detection fails).
    kind = ""
    try:
        kind = jax.devices()[0].device_kind.lower()
    except Exception:
        pass
    is_v5 = "v5" in kind
    bf16_epi = not is_v5            # v5e VPU has no bf16 -> keep f32 epilogue
    min_tiles = 2 if "v7" in kind else 1   # v7x: 2 TensorCores per chip
    block_b = 1024 if not is_v5 else 1024  # stays well inside 16 MiB scoped VMEM

    def ref_f32(x):
        h = jnp.maximum(x @ w1.T + b1, 0.0)
        h = jnp.maximum(h @ w2.T + b2, 0.0)
        return jax.nn.sigmoid(h @ w3.T + b3)

    # Case 1: small batch (single tile).  Case 2: multi-tile grid + ragged
    # tail (B=300 with block_b=128 -> 3 tiles, 84 padded rows).
    for B, blk in ((8, block_b), (300, 128)):
        x = jax.random.normal(kx, (B, 16), jnp.float32)
        out = jax.block_until_ready(
            simple_model_forward(x, *params, block_b=blk,
                                 bf16_epilogue=bf16_epi, min_tiles=min_tiles))
        assert out.shape == (B, 1), out.shape
        assert jnp.allclose(out, ref_f32(x), atol=3e-2), "mismatch vs f32 ref"

    print("KERNEL_OK")
</pallas_src>

<mosaic_0001>
module attributes {stable_mosaic.version = 11 : i64} {
  func.func @_mlp_kernel(%arg0: i32, %arg1: memref<8x16xf32, #tpu.memory_space<vmem>>, %arg2: memref<320x16xbf16, #tpu.memory_space<vmem>>, %arg3: memref<320x1xf32, #tpu.memory_space<vmem>>, %arg4: memref<64x320xbf16, #tpu.memory_space<vmem>>, %arg5: memref<64x1xf32, #tpu.memory_space<vmem>>, %arg6: memref<64x1xf32, #tpu.memory_space<vmem>>, %arg7: memref<1x1xf32, #tpu.memory_space<smem>>, %arg8: memref<1x8xf32, #tpu.memory_space<vmem>>) attributes {dimension_semantics = [#tpu.dimension_semantics<parallel>], iteration_bounds = array<i64: 1>, scalar_prefetch = 0 : i64, scratch_operands = 0 : i64, tpu.core_type = #tpu.core_type<tc>, window_params = [{transform_indices = @transform_0, window_bounds = array<i64: 8, 16>}, {pipeline_mode = #tpu.pipeline_mode<synchronous>, transform_indices = @transform_1, window_bounds = array<i64: 320, 16>}, {pipeline_mode = #tpu.pipeline_mode<synchronous>, transform_indices = @transform_2, window_bounds = array<i64: 320, 1>}, {pipeline_mode = #tpu.pipeline_mode<synchronous>, transform_indices = @transform_3, window_bounds = array<i64: 64, 320>}, {pipeline_mode = #tpu.pipeline_mode<synchronous>, transform_indices = @transform_4, window_bounds = array<i64: 64, 1>}, {pipeline_mode = #tpu.pipeline_mode<synchronous>, transform_indices = @transform_5, window_bounds = array<i64: 64, 1>}, {transform_indices = @transform_6, window_bounds = array<i64: 1, 1>}, {transform_indices = @transform_7, window_bounds = array<i64: 1, 8>}]} {
    %c0 = arith.constant 0 : index
    %c0_0 = arith.constant 0 : index
    %0 = vector.load %arg2[%c0, %c0_0] : memref<320x16xbf16, #tpu.memory_space<vmem>>, vector<320x16xbf16>
    %c0_1 = arith.constant 0 : index
    %c0_2 = arith.constant 0 : index
    %1 = vector.load %arg1[%c0_1, %c0_2] : memref<8x16xf32, #tpu.memory_space<vmem>>, vector<8x16xf32>
    %2 = arith.truncf %1 : vector<8x16xf32> to vector<8x16xbf16>
    %cst = arith.constant dense<0.000000e+00> : vector<320x8xf32>
    %3 = tpu.matmul %0, %2, %cst {dimension_numbers = #tpu.dot_dimension_numbers<[1], [1], [0], [0], [0, 0, 1, 0], [], []>} : vector<320x16xbf16>, vector<8x16xbf16>, vector<320x8xf32> -> vector<320x8xf32>
    %4 = arith.truncf %3 : vector<320x8xf32> to vector<320x8xbf16>
    %c0_3 = arith.constant 0 : index
    %c0_4 = arith.constant 0 : index
    %5 = vector.load %arg3[%c0_3, %c0_4] : memref<320x1xf32, #tpu.memory_space<vmem>>, vector<320x1xf32>
    %6 = arith.truncf %5 : vector<320x1xf32> to vector<320x1xbf16>
    %7 = vector.broadcast %6 : vector<320x1xbf16> to vector<320x8xbf16>
    %8 = arith.addf %4, %7 : vector<320x8xbf16>
    %cst_5 = arith.constant 0.000000e+00 : bf16
    %9 = vector.broadcast %cst_5 : bf16 to vector<320x8xbf16>
    %10 = arith.maximumf %8, %9 : vector<320x8xbf16>
    %c0_6 = arith.constant 0 : index
    %c0_7 = arith.constant 0 : index
    %11 = vector.load %arg4[%c0_6, %c0_7] : memref<64x320xbf16, #tpu.memory_space<vmem>>, vector<64x320xbf16>
    %cst_8 = arith.constant dense<0.000000e+00> : vector<64x8xf32>
    %12 = tpu.matmul %11, %10, %cst_8 {dimension_numbers = #tpu.dot_dimension_numbers<[1], [0], [0], [1], [0, 0, 1, 1], [], []>} : vector<64x320xbf16>, vector<320x8xbf16>, vector<64x8xf32> -> vector<64x8xf32>
    %13 = arith.truncf %12 : vector<64x8xf32> to vector<64x8xbf16>
    %c0_9 = arith.constant 0 : index
    %c0_10 = arith.constant 0 : index
    %14 = vector.load %arg5[%c0_9, %c0_10] : memref<64x1xf32, #tpu.memory_space<vmem>>, vector<64x1xf32>
    %15 = arith.truncf %14 : vector<64x1xf32> to vector<64x1xbf16>
    %16 = vector.broadcast %15 : vector<64x1xbf16> to vector<64x8xbf16>
    %17 = arith.addf %13, %16 : vector<64x8xbf16>
    %cst_11 = arith.constant 0.000000e+00 : bf16
    %18 = vector.broadcast %cst_11 : bf16 to vector<64x8xbf16>
    %19 = arith.maximumf %17, %18 : vector<64x8xbf16>
    %c0_12 = arith.constant 0 : index
    %c0_13 = arith.constant 0 : index
    %20 = vector.load %arg6[%c0_12, %c0_13] : memref<64x1xf32, #tpu.memory_space<vmem>>, vector<64x1xf32>
    %21 = arith.extf %19 : vector<64x8xbf16> to vector<64x8xf32>
    %22 = vector.broadcast %20 : vector<64x1xf32> to vector<64x8xf32>
    %23 = arith.mulf %22, %21 : vector<64x8xf32>
    %cst_14 = arith.constant dense<0.000000e+00> : vector<8xf32>
    %24 = vector.multi_reduction <add>, %23, %cst_14 [0] : vector<64x8xf32> to vector<8xf32>
    %25 = vector.shape_cast %24 : vector<8xf32> to vector<1x8xf32>
    %c0_15 = arith.constant 0 : index
    %c0_16 = arith.constant 0 : index
    %26 = memref.load %arg7[%c0_15, %c0_16] : memref<1x1xf32, #tpu.memory_space<smem>>
    %27 = vector.broadcast %26 : f32 to vector<1x8xf32>
    %28 = arith.addf %25, %27 : vector<1x8xf32>
    %cst_17 = arith.constant 0.000000e+00 : f32
    %29 = vector.broadcast %cst_17 : f32 to vector<1x8xf32>
    %30 = arith.subf %29, %28 : vector<1x8xf32>
    %31 = math.exp %30 : vector<1x8xf32>
    %cst_18 = arith.constant 1.000000e+00 : f32
    %32 = vector.broadcast %cst_18 : f32 to vector<1x8xf32>
    %33 = arith.addf %32, %31 : vector<1x8xf32>
    %34 = tpu.reciprocal %33 {approx = true} : vector<1x8xf32> -> vector<1x8xf32>
    %c0_19 = arith.constant 0 : index
    %c0_20 = arith.constant 0 : index
    %35 = vector.load %arg8[%c0_19, %c0_20] : memref<1x8xf32, #tpu.memory_space<vmem>>, vector<1x8xf32>
    tpu.vector_store %arg8[%c0_19, %c0_20], %34 {strides = array<i32>} : memref<1x8xf32, #tpu.memory_space<vmem>>, vector<1x8xf32>,
    return
  }
  func.func @transform_0(%arg0: i32) -> (i32, i32) {
    %c0_i32 = arith.constant 0 : i32
    %c0_i32_0 = arith.constant 0 : i32
    return %arg0, %c0_i32 : i32, i32
  }
  func.func @transform_1(%arg0: i32) -> (i32, i32) {
    %c0_i32 = arith.constant 0 : i32
    %c0_i32_0 = arith.constant 0 : i32
    %c0_i32_1 = arith.constant 0 : i32
    return %c0_i32, %c0_i32_0 : i32, i32
  }
  func.func @transform_2(%arg0: i32) -> (i32, i32) {
    %c0_i32 = arith.constant 0 : i32
    %c0_i32_0 = arith.constant 0 : i32
    %c0_i32_1 = arith.constant 0 : i32
    return %c0_i32, %c0_i32_0 : i32, i32
  }
  func.func @transform_3(%arg0: i32) -> (i32, i32) {
    %c0_i32 = arith.constant 0 : i32
    %c0_i32_0 = arith.constant 0 : i32
    %c0_i32_1 = arith.constant 0 : i32
    return %c0_i32, %c0_i32_0 : i32, i32
  }
  func.func @transform_4(%arg0: i32) -> (i32, i32) {
    %c0_i32 = arith.constant 0 : i32
    %c0_i32_0 = arith.constant 0 : i32
    %c0_i32_1 = arith.constant 0 : i32
    return %c0_i32, %c0_i32_0 : i32, i32
  }
  func.func @transform_5(%arg0: i32) -> (i32, i32) {
    %c0_i32 = arith.constant 0 : i32
    %c0_i32_0 = arith.constant 0 : i32
    %c0_i32_1 = arith.constant 0 : i32
    return %c0_i32, %c0_i32_0 : i32, i32
  }
  func.func @transform_6(%arg0: i32) -> (i32, i32) {
    %c0_i32 = arith.constant 0 : i32
    %c0_i32_0 = arith.constant 0 : i32
    %c0_i32_1 = arith.constant 0 : i32
    return %c0_i32, %c0_i32_0 : i32, i32
  }
  func.func @transform_7(%arg0: i32) -> (i32, i32) {
    %c0_i32 = arith.constant 0 : i32
    %c0_i32_0 = arith.constant 0 : i32
    return %c0_i32, %arg0 : i32, i32
  }
}

</mosaic_0001>

<llo_original>
// kernel: simple_model_forward.1
$region0: #{simple_model_forward.1}
  #allocation0 [shape = 'u32[]', space=smem, size = 0x4, offset = 0x4, fixed_abs, tag = 'smem constant byte address 0x4 - core index']
  #allocation1 [shape = 'u32[144,128]{1,0:T(1,128)}', space=vmem, size = 0x12000, scoped, tag = 'internal scratch']
  #allocation2 [shape = 'f32[1,1]{1,0:T(1,128)S(6)}', space=smem, size = 0x200, scoped, tag = 'scoped memory for simple_model_forward.1']
  %s0 = inlined_call_operand.vmem [shape: f32[8,16], index: 0, kind: input, shape index: {}]
  %s1 = inlined_call_operand.vmem [shape: bf16[320,16], index: 1, kind: input, shape index: {}]
  %s2 = inlined_call_operand.vmem [shape: f32[320,1], index: 2, kind: input, shape index: {}]
  %s3 = inlined_call_operand.vmem [shape: bf16[64,320], index: 3, kind: input, shape index: {}]
  %s4 = inlined_call_operand.vmem [shape: f32[64,1], index: 4, kind: input, shape index: {}]
  %s5 = inlined_call_operand.vmem [shape: f32[64,1], index: 5, kind: input, shape index: {}]
  %s6 = inlined_call_operand.<no memory space> [shape: f32[1,1], index: 6, kind: input, shape index: {}]
  %s7 = inlined_call_operand.hbm [shape: f32[1,8], index: 7, kind: output, shape index: {}]
  %s8 = sld [smem:[#allocation0]]
  $region38: #{simple_model_forward.1} parent=0
    _
  %s10 = ssub.s32 1, %s8
  %s11 = scalar_select 0, %s10, %s8
  %12 = sst [smem:[#allocation2]] %s6
  $region1: #{simple_model_forward.1} parent=0
    #allocation3 [shape = 'u8[512]{0}', space=vmem, size = 0x400, scoped, tag = 'output window, operand 0, single buffered']
    #allocation4 [shape = 's32[1]{0}', space=sflag, size = 0x4, scoped, tag = 'scoped memory for simple_model_forward.1']
    %13 = vsyncpa [#allocation4], 0
    // Predicated region
    $region2: #{simple_model_forward.1} parent=1 // pred_check
      _
    $region3: #{simple_model_forward.1} parent=1 // pred_check_branch
      %15 = sbr.rel (0) target = $region5
    $region4: #{simple_model_forward.1} parent=1 // pred_region
      _
    $region5: #{simple_model_forward.1} parent=1 // pred_fallthru
      _
    // Predicated region
    $region6: #{simple_model_forward.1} parent=1 // pred_check
      _
    $region7: #{simple_model_forward.1} parent=1 // pred_check_branch
      %17 = sbr.rel (0) target = $region9
    $region8: #{simple_model_forward.1} parent=1 // pred_region
      _
    $region9: #{simple_model_forward.1} parent=1 // pred_fallthru
      _
    // Predicated region
    $region10: #{simple_model_forward.1} parent=1 // pred_check
      _
    $region11: #{simple_model_forward.1} parent=1 // pred_check_branch
      %19 = sbr.rel (0) target = $region13
    $region12: #{simple_model_forward.1} parent=1 // pred_region
      _
    $region13: #{simple_model_forward.1} parent=1 // pred_fallthru
      _
    // Predicated region
    $region14: #{simple_model_forward.1} parent=1 // pred_check
      _
    $region15: #{simple_model_forward.1} parent=1 // pred_check_branch
      %21 = sbr.rel (0) target = $region17
    $region16: #{simple_model_forward.1} parent=1 // pred_region
      _
    $region17: #{simple_model_forward.1} parent=1 // pred_fallthru
      _
    // Predicated region
    $region18: #{simple_model_forward.1} parent=1 // pred_check
      _
    $region19: #{simple_model_forward.1} parent=1 // pred_check_branch
      %23 = sbr.rel (0) target = $region21
    $region20: #{simple_model_forward.1} parent=1 // pred_region
      _
    $region21: #{simple_model_forward.1} parent=1 // pred_fallthru
      _
    // Predicated region
    $region22: #{simple_model_forward.1} parent=1 // pred_check
      _
    $region23: #{simple_model_forward.1} parent=1 // pred_check_branch
      %25 = sbr.rel (0) target = $region25
    $region24: #{simple_model_forward.1} parent=1 // pred_region
      _
    $region25: #{simple_model_forward.1} parent=1 // pred_fallthru
      _
    // Predicated region
    $region26: #{simple_model_forward.1} parent=1 // pred_check
      _
    $region27: #{simple_model_forward.1} parent=1 // pred_check_branch
      %27 = sbr.rel (0) target = $region29
    $region28: #{simple_model_forward.1} parent=1 // pred_region
      _
    $region29: #{simple_model_forward.1} parent=1 // pred_fallthru
      _
    %v29 = vld [vmem:[%s1] sm:$0xf]
    %v30 = vld [vmem:[%s1 + $0x4] sm:$0xf]
    %v31 = vld [vmem:[%s1 + $0x8] sm:$0xf]
    %v32 = vld [vmem:[%s1 + $0xc] sm:$0xf]
    %v33 = vld [vmem:[%s1 + $0x10] sm:$0xf]
    %v34 = vld [vmem:[%s1 + $0x14] sm:$0xf]
    %v35 = vld [vmem:[%s1 + $0x18] sm:$0xf]
    %v36 = vld [vmem:[%s1 + $0x1c] sm:$0xf]
    %v37 = vld [vmem:[%s1 + $0x20] sm:$0xf]
    %v38 = vld [vmem:[%s1 + $0x24] sm:$0xf]
    %v39 = vld [vmem:[%s1 + $0x28] sm:$0xf]
    %v40 = vld [vmem:[%s1 + $0x2c] sm:$0xf]
    %v41 = vld [vmem:[%s1 + $0x30] sm:$0xf]
    %v42 = vld [vmem:[%s1 + $0x34] sm:$0xf]
    %v43 = vld [vmem:[%s1 + $0x38] sm:$0xf]
    %v44 = vld [vmem:[%s1 + $0x3c] sm:$0xf]
    %v45 = vld [vmem:[%s1 + $0x40] sm:$0xf]
    %v46 = vld [vmem:[%s1 + $0x44] sm:$0xf]
    %v47 = vld [vmem:[%s1 + $0x48] sm:$0xf]
    %v48 = vld [vmem:[%s1 + $0x4c] sm:$0xf]
    %v49 = vld [vmem:[%s1 + $0x50] sm:$0xf]
    %v50 = vld [vmem:[%s1 + $0x54] sm:$0xf]
    %v51 = vld [vmem:[%s1 + $0x58] sm:$0xf]
    %v52 = vld [vmem:[%s1 + $0x5c] sm:$0xf]
    %v53 = vld [vmem:[%s1 + $0x60] sm:$0xf]
    %v54 = vld [vmem:[%s1 + $0x64] sm:$0xf]
    %v55 = vld [vmem:[%s1 + $0x68] sm:$0xf]
    %v56 = vld [vmem:[%s1 + $0x6c] sm:$0xf]
    %v57 = vld [vmem:[%s1 + $0x70] sm:$0xf]
    %v58 = vld [vmem:[%s1 + $0x74] sm:$0xf]
    %v59 = vld [vmem:[%s1 + $0x78] sm:$0xf]
    %v60 = vld [vmem:[%s1 + $0x7c] sm:$0xf]
    %v61 = vld [vmem:[%s1 + $0x80] sm:$0xf]
    %v62 = vld [vmem:[%s1 + $0x84] sm:$0xf]
    %v63 = vld [vmem:[%s1 + $0x88] sm:$0xf]
    %v64 = vld [vmem:[%s1 + $0x8c] sm:$0xf]
    %v65 = vld [vmem:[%s1 + $0x90] sm:$0xf]
    %v66 = vld [vmem:[%s1 + $0x94] sm:$0xf]
    %v67 = vld [vmem:[%s1 + $0x98] sm:$0xf]
    %v68 = vld [vmem:[%s1 + $0x9c] sm:$0xf]
    %v69 = vld [vmem:[%s0] sm:$0xff]
    %v70 = vpack.c.bf16 %v69, %v69
    %v111 = vunpack.c.l.b16 %v29
    %v112 = vunpack.c.l.b16 %v30
    %v113 = vunpack.c.l.b16 %v31
    %v114 = vunpack.c.l.b16 %v32
    %v115 = vunpack.c.l.b16 %v33
    %v116 = vunpack.c.l.b16 %v34
    %v117 = vunpack.c.l.b16 %v35
    %v118 = vunpack.c.l.b16 %v36
    %v119 = vunpack.c.l.b16 %v37
    %v120 = vunpack.c.l.b16 %v38
    %v121 = vunpack.c.l.b16 %v39
    %v122 = vunpack.c.l.b16 %v40
    %v123 = vunpack.c.l.b16 %v41
    %v124 = vunpack.c.l.b16 %v42
    %v125 = vunpack.c.l.b16 %v43
    %v126 = vunpack.c.l.b16 %v44
    %v127 = vunpack.c.l.b16 %v45
    %v128 = vunpack.c.l.b16 %v46
    %v129 = vunpack.c.l.b16 %v47
    %v130 = vunpack.c.l.b16 %v48
    %v131 = vunpack.c.l.b16 %v49
    %v132 = vunpack.c.l.b16 %v50
    %v133 = vunpack.c.l.b16 %v51
    %v134 = vunpack.c.l.b16 %v52
    %v135 = vunpack.c.l.b16 %v53
    %v136 = vunpack.c.l.b16 %v54
    %v137 = vunpack.c.l.b16 %v55
    %v138 = vunpack.c.l.b16 %v56
    %v139 = vunpack.c.l.b16 %v57
    %v140 = vunpack.c.l.b16 %v58
    %v141 = vunpack.c.l.b16 %v59
    %v142 = vunpack.c.l.b16 %v60
    %v143 = vunpack.c.l.b16 %v61
    %v144 = vunpack.c.l.b16 %v62
    %v145 = vunpack.c.l.b16 %v63
    %v146 = vunpack.c.l.b16 %v64
    %v147 = vunpack.c.l.b16 %v65
    %v148 = vunpack.c.l.b16 %v66
    %v149 = vunpack.c.l.b16 %v67
    %v150 = vunpack.c.l.b16 %v68
    %v151 = vpack.c.b16 %v112, %v111
    %v152 = vpack.c.b16 %v114, %v113
    %v153 = vpack.c.b16 %v116, %v115
    %v154 = vpack.c.b16 %v118, %v117
    %v155 = vpack.c.b16 %v120, %v119
    %v156 = vpack.c.b16 %v122, %v121
    %v157 = vpack.c.b16 %v124, %v123
    %v158 = vpack.c.b16 %v126, %v125
    %v159 = vpack.c.b16 %v128, %v127
    %v160 = vpack.c.b16 %v130, %v129
    %v161 = vpack.c.b16 %v132, %v131
    %v162 = vpack.c.b16 %v134, %v133
    %v163 = vpack.c.b16 %v136, %v135
    %v164 = vpack.c.b16 %v138, %v137
    %v165 = vpack.c.b16 %v140, %v139
    %v166 = vpack.c.b16 %v142, %v141
    %v167 = vpack.c.b16 %v144, %v143
    %v168 = vpack.c.b16 %v146, %v145
    %v169 = vpack.c.b16 %v148, %v147
    %v170 = vpack.c.b16 %v150, %v149
    %vm171 = vcmask 130048
    %v173 = vsel %vm171, %v151, 0
    %v176 = vsel %vm171, %v152, 0
    %v179 = vsel %vm171, %v153, 0
    %v182 = vsel %vm171, %v154, 0
    %v185 = vsel %vm171, %v155, 0
    %v188 = vsel %vm171, %v156, 0
    %v191 = vsel %vm171, %v157, 0
    %v194 = vsel %vm171, %v158, 0
    %v197 = vsel %vm171, %v159, 0
    %v200 = vsel %vm171, %v160, 0
    %v203 = vsel %vm171, %v161, 0
    %v206 = vsel %vm171, %v162, 0
    %v209 = vsel %vm171, %v163, 0
    %v212 = vsel %vm171, %v164, 0
    %v215 = vsel %vm171, %v165, 0
    %v218 = vsel %vm171, %v166, 0
    %v221 = vsel %vm171, %v167, 0
    %v224 = vsel %vm171, %v168, 0
    %v227 = vsel %vm171, %v169, 0
    %v230 = vsel %vm171, %v170, 0
    %v233 = vsel %vm171, %v70, 0
    %235 = vmatprep.subr.bf16.mxu0 0
    %236 = vmatpush1.bf16.xpose.msra.mxu0 %v233
    %237 = vmatprep.subr.bf16.mxu0 0
    %238 = vmatpush1.bf16.xpose.msra.mxu0 0
    %239 = vmatprep.subr.bf16.mxu0 0
    %240 = vmatpush1.bf16.xpose.msra.mxu0 0
    %241 = vmatprep.subr.bf16.mxu0 0
    %242 = vmatpush1.bf16.xpose.msra.mxu0 0
    %243 = vmatprep.subr.bf16.mxu0 0
    %244 = vmatpush1.bf16.xpose.msra.mxu0 0
    %245 = vmatprep.subr.bf16.mxu0 0
    %246 = vmatpush1.bf16.xpose.msra.mxu0 0
    %247 = vmatprep.subr.bf16.mxu0 0
    %248 = vmatpush1.bf16.xpose.msra.mxu0 0
    %249 = vmatprep.subr.bf16.mxu0 0
    %250 = vmatpush1.bf16.xpose.msra.mxu0 0
    %251 = vmatprep.subr.bf16.mxu0 0
    %252 = vmatpush1.bf16.xpose.msra.mxu0 0
    %253 = vmatprep.subr.bf16.mxu0 0
    %254 = vmatpush1.bf16.xpose.msra.mxu0 0
    %255 = vmatprep.subr.bf16.mxu0 0
    %256 = vmatpush1.bf16.xpose.msra.mxu0 0
    %257 = vmatprep.subr.bf16.mxu0 0
    %258 = vmatpush1.bf16.xpose.msra.mxu0 0
    %259 = vmatprep.subr.bf16.mxu0 0
    %260 = vmatpush1.bf16.xpose.msra.mxu0 0
    %261 = vmatprep.subr.bf16.mxu0 0
    %262 = vmatpush1.bf16.xpose.msra.mxu0 0
    %263 = vmatprep.subr.bf16.mxu0 0
    %264 = vmatpush1.bf16.xpose.msra.mxu0 0
    %265 = vmatprep.subr.bf16.mxu0 0
    %266 = vmatpush1.bf16.xpose.msra.mxu0 0
    %267 = vmatprep.mubr.bf16.mxu0 0
    %268 = vmatmul.mubr.bf16.gmra.mrb[0].mxu0 %v173
    %v269 = vpop.f32.mrb[0].mxu0
    %v270 = vadd.f32 0.0, %v269
    %v271 = vpop.f32.mrb[0].mxu0
    %v272 = vpop.f32.mrb[0].mxu0
    %v273 = vadd.f32 0.0, %v272
    %v274 = vpop.f32.mrb[0].mxu0
    %275 = vmatprep.mubr.bf16.mxu0 0
    %276 = vmatmul.mubr.bf16.gmra.mrb[0].mxu0 %v176
    %v277 = vpop.f32.mrb[0].mxu0
    %v278 = vadd.f32 0.0, %v277
    %v279 = vpop.f32.mrb[0].mxu0
    %v280 = vpop.f32.mrb[0].mxu0
    %v281 = vadd.f32 0.0, %v280
    %v282 = vpop.f32.mrb[0].mxu0
    %283 = vmatprep.mubr.bf16.mxu0 0
    %284 = vmatmul.mubr.bf16.gmra.mrb[0].mxu0 %v179
    %v285 = vpop.f32.mrb[0].mxu0
    %v286 = vadd.f32 0.0, %v285
    %v287 = vpop.f32.mrb[0].mxu0
    %v288 = vpop.f32.mrb[0].mxu0
    %v289 = vadd.f32 0.0, %v288
    %v290 = vpop.f32.mrb[0].mxu0
    %291 = vmatprep.mubr.bf16.mxu0 0
    %292 = vmatmul.mubr.bf16.gmra.mrb[0].mxu0 %v182
    %v293 = vpop.f32.mrb[0].mxu0
    %v294 = vadd.f32 0.0, %v293
    %v295 = vpop.f32.mrb[0].mxu0
    %v296 = vpop.f32.mrb[0].mxu0
    %v297 = vadd.f32 0.0, %v296
    %v298 = vpop.f32.mrb[0].mxu0
    %299 = vmatprep.mubr.bf16.mxu0 0
    %300 = vmatmul.mubr.bf16.gmra.mrb[0].mxu0 %v185
    %v301 = vpop.f32.mrb[0].mxu0
    %v302 = vadd.f32 0.0, %v301
    %v303 = vpop.f32.mrb[0].mxu0
    %v304 = vpop.f32.mrb[0].mxu0
    %v305 = vadd.f32 0.0, %v304
    %v306 = vpop.f32.mrb[0].mxu0
    %307 = vmatprep.mubr.bf16.mxu0 0
    %308 = vmatmul.mubr.bf16.gmra.mrb[0].mxu0 %v188
    %v309 = vpop.f32.mrb[0].mxu0
    %v310 = vadd.f32 0.0, %v309
    %v311 = vpop.f32.mrb[0].mxu0
    %v312 = vpop.f32.mrb[0].mxu0
    %v313 = vadd.f32 0.0, %v312
    %v314 = vpop.f32.mrb[0].mxu0
    %315 = vmatprep.mubr.bf16.mxu0 0
    %316 = vmatmul.mubr.bf16.gmra.mrb[0].mxu0 %v191
    %v317 = vpop.f32.mrb[0].mxu0
    %v318 = vadd.f32 0.0, %v317
    %v319 = vpop.f32.mrb[0].mxu0
    %v320 = vpop.f32.mrb[0].mxu0
    %v321 = vadd.f32 0.0, %v320
    %v322 = vpop.f32.mrb[0].mxu0
    %323 = vmatprep.mubr.bf16.mxu0 0
    %324 = vmatmul.mubr.bf16.gmra.mrb[0].mxu0 %v194
    %v325 = vpop.f32.mrb[0].mxu0
    %v326 = vadd.f32 0.0, %v325
    %v327 = vpop.f32.mrb[0].mxu0
    %v328 = vpop.f32.mrb[0].mxu0
    %v329 = vadd.f32 0.0, %v328
    %v330 = vpop.f32.mrb[0].mxu0
    %331 = vmatprep.mubr.bf16.mxu0 0
    %332 = vmatmul.mubr.bf16.gmra.mrb[0].mxu0 %v197
    %v333 = vpop.f32.mrb[0].mxu0
    %v334 = vadd.f32 0.0, %v333
    %v335 = vpop.f32.mrb[0].mxu0
    %v336 = vpop.f32.mrb[0].mxu0
    %v337 = vadd.f32 0.0, %v336
    %v338 = vpop.f32.mrb[0].mxu0
    %339 = vmatprep.mubr.bf16.mxu0 0
    %340 = vmatmul.mubr.bf16.gmra.mrb[0].mxu0 %v200
    %v341 = vpop.f32.mrb[0].mxu0
    %v342 = vadd.f32 0.0, %v341
    %v343 = vpop.f32.mrb[0].mxu0
    %v344 = vpop.f32.mrb[0].mxu0
    %v345 = vadd.f32 0.0, %v344
    %v346 = vpop.f32.mrb[0].mxu0
    %347 = vmatprep.mubr.bf16.mxu0 0
    %348 = vmatmul.mubr.bf16.gmra.mrb[0].mxu0 %v203
    %v349 = vpop.f32.mrb[0].mxu0
    %v350 = vadd.f32 0.0, %v349
    %v351 = vpop.f32.mrb[0].mxu0
    %v352 = vpop.f32.mrb[0].mxu0
    %v353 = vadd.f32 0.0, %v352
    %v354 = vpop.f32.mrb[0].mxu0
    %355 = vmatprep.mubr.bf16.mxu0 0
    %356 = vmatmul.mubr.bf16.gmra.mrb[0].mxu0 %v206
    %v357 = vpop.f32.mrb[0].mxu0
    %v358 = vadd.f32 0.0, %v357
    %v359 = vpop.f32.mrb[0].mxu0
    %v360 = vpop.f32.mrb[0].mxu0
    %v361 = vadd.f32 0.0, %v360
    %v362 = vpop.f32.mrb[0].mxu0
    %363 = vmatprep.mubr.bf16.mxu0 0
    %364 = vmatmul.mubr.bf16.gmra.mrb[0].mxu0 %v209
    %v365 = vpop.f32.mrb[0].mxu0
    %v366 = vadd.f32 0.0, %v365
    %v367 = vpop.f32.mrb[0].mxu0
    %v368 = vpop.f32.mrb[0].mxu0
    %v369 = vadd.f32 0.0, %v368
    %v370 = vpop.f32.mrb[0].mxu0
    %371 = vmatprep.mubr.bf16.mxu0 0
    %372 = vmatmul.mubr.bf16.gmra.mrb[0].mxu0 %v212
    %v373 = vpop.f32.mrb[0].mxu0
    %v374 = vadd.f32 0.0, %v373
    %v375 = vpop.f32.mrb[0].mxu0
    %v376 = vpop.f32.mrb[0].mxu0
    %v377 = vadd.f32 0.0, %v376
    %v378 = vpop.f32.mrb[0].mxu0
    %379 = vmatprep.mubr.bf16.mxu0 0
    %380 = vmatmul.mubr.bf16.gmra.mrb[0].mxu0 %v215
    %v381 = vpop.f32.mrb[0].mxu0
    %v382 = vadd.f32 0.0, %v381
    %v383 = vpop.f32.mrb[0].mxu0
    %v384 = vpop.f32.mrb[0].mxu0
    %v385 = vadd.f32 0.0, %v384
    %v386 = vpop.f32.mrb[0].mxu0
    %387 = vmatprep.mubr.bf16.mxu0 0
    %388 = vmatmul.mubr.bf16.gmra.mrb[0].mxu0 %v218
    %v389 = vpop.f32.mrb[0].mxu0
    %v390 = vadd.f32 0.0, %v389
    %v391 = vpop.f32.mrb[0].mxu0
    %v392 = vpop.f32.mrb[0].mxu0
    %v393 = vadd.f32 0.0, %v392
    %v394 = vpop.f32.mrb[0].mxu0
    %395 = vmatprep.mubr.bf16.mxu0 0
    %396 = vmatmul.mubr.bf16.gmra.mrb[0].mxu0 %v221
    %v397 = vpop.f32.mrb[0].mxu0
    %v398 = vadd.f32 0.0, %v397
    %v399 = vpop.f32.mrb[0].mxu0
    %v400 = vpop.f32.mrb[0].mxu0
    %v401 = vadd.f32 0.0, %v400
    %v402 = vpop.f32.mrb[0].mxu0
    %403 = vmatprep.mubr.bf16.mxu0 0
    %404 = vmatmul.mubr.bf16.gmra.mrb[0].mxu0 %v224
    %v405 = vpop.f32.mrb[0].mxu0
    %v406 = vadd.f32 0.0, %v405
    %v407 = vpop.f32.mrb[0].mxu0
    %v408 = vpop.f32.mrb[0].mxu0
    %v409 = vadd.f32 0.0, %v408
    %v410 = vpop.f32.mrb[0].mxu0
    %411 = vmatprep.mubr.bf16.mxu0 0
    %412 = vmatmul.mubr.bf16.gmra.mrb[0].mxu0 %v227
    %v413 = vpop.f32.mrb[0].mxu0
    %v414 = vadd.f32 0.0, %v413
    %v415 = vpop.f32.mrb[0].mxu0
    %v416 = vpop.f32.mrb[0].mxu0
    %v417 = vadd.f32 0.0, %v416
    %v418 = vpop.f32.mrb[0].mxu0
    %419 = vmatprep.mubr.bf16.mxu0 0
    %420 = vmatmul.mubr.bf16.gmra.mrb[0].mxu0 %v230
    %v421 = vpop.f32.mrb[0].mxu0
    %v422 = vadd.f32 0.0, %v421
    %v423 = vpop.f32.mrb[0].mxu0
    %v424 = vpop.f32.mrb[0].mxu0
    %v425 = vadd.f32 0.0, %v424
    %v426 = vpop.f32.mrb[0].mxu0
    %427 = vdwg.mxu0
    %v428 = vpack.c.bf16 %v273, %v270
    %v429 = vpack.c.bf16 %v281, %v278
    %v430 = vpack.c.bf16 %v289, %v286
    %v431 = vpack.c.bf16 %v297, %v294
    %v432 = vpack.c.bf16 %v305, %v302
    %v433 = vpack.c.bf16 %v313, %v310
    %v434 = vpack.c.bf16 %v321, %v318
    %v435 = vpack.c.bf16 %v329, %v326
    %v436 = vpack.c.bf16 %v337, %v334
    %v437 = vpack.c.bf16 %v345, %v342
    %v438 = vpack.c.bf16 %v353, %v350
    %v439 = vpack.c.bf16 %v361, %v358
    %v440 = vpack.c.bf16 %v369, %v366
    %v441 = vpack.c.bf16 %v377, %v374
    %v442 = vpack.c.bf16 %v385, %v382
    %v443 = vpack.c.bf16 %v393, %v390
    %v444 = vpack.c.bf16 %v401, %v398
    %v445 = vpack.c.bf16 %v409, %v406
    %v446 = vpack.c.bf16 %v417, %v414
    %v447 = vpack.c.bf16 %v425, %v422
    %v448 = vld [vmem:[%s2] sm:$0xff]
    %v449 = vld [vmem:[%s2 + $0x8] sm:$0xff]
    %v450 = vld [vmem:[%s2 + $0x10] sm:$0xff]
    %v451 = vld [vmem:[%s2 + $0x18] sm:$0xff]
    %v452 = vld [vmem:[%s2 + $0x20] sm:$0xff]
    %v453 = vld [vmem:[%s2 + $0x28] sm:$0xff]
    %v454 = vld [vmem:[%s2 + $0x30] sm:$0xff]
    %v455 = vld [vmem:[%s2 + $0x38] sm:$0xff]
    %v456 = vld [vmem:[%s2 + $0x40] sm:$0xff]
    %v457 = vld [vmem:[%s2 + $0x48] sm:$0xff]
    %v458 = vld [vmem:[%s2 + $0x50] sm:$0xff]
    %v459 = vld [vmem:[%s2 + $0x58] sm:$0xff]
    %v460 = vld [vmem:[%s2 + $0x60] sm:$0xff]
    %v461 = vld [vmem:[%s2 + $0x68] sm:$0xff]
    %v462 = vld [vmem:[%s2 + $0x70] sm:$0xff]
    %v463 = vld [vmem:[%s2 + $0x78] sm:$0xff]
    %v464 = vld [vmem:[%s2 + $0x80] sm:$0xff]
    %v465 = vld [vmem:[%s2 + $0x88] sm:$0xff]
    %v466 = vld [vmem:[%s2 + $0x90] sm:$0xff]
    %v467 = vld [vmem:[%s2 + $0x98] sm:$0xff]
    %v468 = vld [vmem:[%s2 + $0xa0] sm:$0xff]
    %v469 = vld [vmem:[%s2 + $0xa8] sm:$0xff]
    %v470 = vld [vmem:[%s2 + $0xb0] sm:$0xff]
    %v471 = vld [vmem:[%s2 + $0xb8] sm:$0xff]
    %v472 = vld [vmem:[%s2 + $0xc0] sm:$0xff]
    %v473 = vld [vmem:[%s2 + $0xc8] sm:$0xff]
    %v474 = vld [vmem:[%s2 + $0xd0] sm:$0xff]
    %v475 = vld [vmem:[%s2 + $0xd8] sm:$0xff]
    %v476 = vld [vmem:[%s2 + $0xe0] sm:$0xff]
    %v477 = vld [vmem:[%s2 + $0xe8] sm:$0xff]
    %v478 = vld [vmem:[%s2 + $0xf0] sm:$0xff]
    %v479 = vld [vmem:[%s2 + $0xf8] sm:$0xff]
    %v480 = vld [vmem:[%s2 + $0x100] sm:$0xff]
    %v481 = vld [vmem:[%s2 + $0x108] sm:$0xff]
    %v482 = vld [vmem:[%s2 + $0x110] sm:$0xff]
    %v483 = vld [vmem:[%s2 + $0x118] sm:$0xff]
    %v484 = vld [vmem:[%s2 + $0x120] sm:$0xff]
    %v485 = vld [vmem:[%s2 + $0x128] sm:$0xff]
    %v486 = vld [vmem:[%s2 + $0x130] sm:$0xff]
    %v487 = vld [vmem:[%s2 + $0x138] sm:$0xff]
    %v488 = vpack.c.bf16 %v449, %v448
    %v489 = vpack.c.bf16 %v451, %v450
    %v490 = vpack.c.bf16 %v453, %v452
    %v491 = vpack.c.bf16 %v455, %v454
    %v492 = vpack.c.bf16 %v457, %v456
    %v493 = vpack.c.bf16 %v459, %v458
    %v494 = vpack.c.bf16 %v461, %v460
    %v495 = vpack.c.bf16 %v463, %v462
    %v496 = vpack.c.bf16 %v465, %v464
    %v497 = vpack.c.bf16 %v467, %v466
    %v498 = vpack.c.bf16 %v469, %v468
    %v499 = vpack.c.bf16 %v471, %v470
    %v500 = vpack.c.bf16 %v473, %v472
    %v501 = vpack.c.bf16 %v475, %v474
    %v502 = vpack.c.bf16 %v477, %v476
    %v503 = vpack.c.bf16 %v479, %v478
    %v504 = vpack.c.bf16 %v481, %v480
    %v505 = vpack.c.bf16 %v483, %v482
    %v506 = vpack.c.bf16 %v485, %v484
    %v507 = vpack.c.bf16 %v487, %v486
    %509 = vset.pattern.permute.xlu0 0
    %510 = vperm.xlu0 %509, %v488
    %v511 = vpop.permute.xlu0 %510
    %514 = vset.pattern.permute.xlu0 0
    %515 = vperm.xlu0 %514, %v489
    %v516 = vpop.permute.xlu0 %515
    %519 = vset.pattern.permute.xlu0 0
    %520 = vperm.xlu0 %519, %v490
    %v521 = vpop.permute.xlu0 %520
    %524 = vset.pattern.permute.xlu0 0
    %525 = vperm.xlu0 %524, %v491
    %v526 = vpop.permute.xlu0 %525
    %529 = vset.pattern.permute.xlu0 0
    %530 = vperm.xlu0 %529, %v492
    %v531 = vpop.permute.xlu0 %530
    %534 = vset.pattern.permute.xlu0 0
    %535 = vperm.xlu0 %534, %v493
    %v536 = vpop.permute.xlu0 %535
    %539 = vset.pattern.permute.xlu0 0
    %540 = vperm.xlu0 %539, %v494
    %v541 = vpop.permute.xlu0 %540
    %544 = vset.pattern.permute.xlu0 0
    %545 = vperm.xlu0 %544, %v495
    %v546 = vpop.permute.xlu0 %545
    %549 = vset.pattern.permute.xlu0 0
    %550 = vperm.xlu0 %549, %v496
    %v551 = vpop.permute.xlu0 %550
    %554 = vset.pattern.permute.xlu0 0
    %555 = vperm.xlu0 %554, %v497
    %v556 = vpop.permute.xlu0 %555
    %559 = vset.pattern.permute.xlu0 0
    %560 = vperm.xlu0 %559, %v498
    %v561 = vpop.permute.xlu0 %560
    %564 = vset.pattern.permute.xlu0 0
    %565 = vperm.xlu0 %564, %v499
    %v566 = vpop.permute.xlu0 %565
    %569 = vset.pattern.permute.xlu0 0
    %570 = vperm.xlu0 %569, %v500
    %v571 = vpop.permute.xlu0 %570
    %574 = vset.pattern.permute.xlu0 0
    %575 = vperm.xlu0 %574, %v501
    %v576 = vpop.permute.xlu0 %575
    %579 = vset.pattern.permute.xlu0 0
    %580 = vperm.xlu0 %579, %v502
    %v581 = vpop.permute.xlu0 %580
    %584 = vset.pattern.permute.xlu0 0
    %585 = vperm.xlu0 %584, %v503
    %v586 = vpop.permute.xlu0 %585
    %589 = vset.pattern.permute.xlu0 0
    %590 = vperm.xlu0 %589, %v504
    %v591 = vpop.permute.xlu0 %590
    %594 = vset.pattern.permute.xlu0 0
    %595 = vperm.xlu0 %594, %v505
    %v596 = vpop.permute.xlu0 %595
    %599 = vset.pattern.permute.xlu0 0
    %600 = vperm.xlu0 %599, %v506
    %v601 = vpop.permute.xlu0 %600
    %604 = vset.pattern.permute.xlu0 0
    %605 = vperm.xlu0 %604, %v507
    %v606 = vpop.permute.xlu0 %605
    %v608 = vadd.bf16 %v428, %v511
    %v609 = vadd.bf16 %v429, %v516
    %v610 = vadd.bf16 %v430, %v521
    %v611 = vadd.bf16 %v431, %v526
    %v612 = vadd.bf16 %v432, %v531
    %v613 = vadd.bf16 %v433, %v536
    %v614 = vadd.bf16 %v434, %v541
    %v615 = vadd.bf16 %v435, %v546
    %v616 = vadd.bf16 %v436, %v551
    %v617 = vadd.bf16 %v437, %v556
    %v618 = vadd.bf16 %v438, %v561
    %v619 = vadd.bf16 %v439, %v566
    %v620 = vadd.bf16 %v440, %v571
    %v621 = vadd.bf16 %v441, %v576
    %v622 = vadd.bf16 %v442, %v581
    %v623 = vadd.bf16 %v443, %v586
    %v624 = vadd.bf16 %v444, %v591
    %v625 = vadd.bf16 %v445, %v596
    %v626 = vadd.bf16 %v446, %v601
    %v627 = vadd.bf16 %v447, %v606
    %v628 = vmax.bf16 %v608, 0
    %v629 = vmax.bf16 %v609, 0
    %v630 = vmax.bf16 %v610, 0
    %v631 = vmax.bf16 %v611, 0
    %v632 = vmax.bf16 %v612, 0
    %v633 = vmax.bf16 %v613, 0
    %v634 = vmax.bf16 %v614, 0
    %v635 = vmax.bf16 %v615, 0
    %v636 = vmax.bf16 %v616, 0
    %v637 = vmax.bf16 %v617, 0
    %v638 = vmax.bf16 %v618, 0
    %v639 = vmax.bf16 %v619, 0
    %v640 = vmax.bf16 %v620, 0
    %v641 = vmax.bf16 %v621, 0
    %v642 = vmax.bf16 %v622, 0
    %v643 = vmax.bf16 %v623, 0
    %v644 = vmax.bf16 %v624, 0
    %v645 = vmax.bf16 %v625, 0
    %v646 = vmax.bf16 %v626, 0
    %v647 = vmax.bf16 %v627, 0
    %v648 = vld [vmem:[%s3] sm:$0xff]
    %v649 = vld [vmem:[%s3 + $0x8] sm:$0xf]
    %v650 = vld [vmem:[%s3 + $0xc] sm:$0xff]
    %v651 = vld [vmem:[%s3 + $0x14] sm:$0xf]
    %v652 = vld [vmem:[%s3 + $0x18] sm:$0xff]
    %v653 = vld [vmem:[%s3 + $0x20] sm:$0xf]
    %v654 = vld [vmem:[%s3 + $0x24] sm:$0xff]
    %v655 = vld [vmem:[%s3 + $0x2c] sm:$0xf]
    %v656 = vld [vmem:[%s3 + $0x30] sm:$0xff]
    %v657 = vld [vmem:[%s3 + $0x38] sm:$0xf]
    %v658 = vld [vmem:[%s3 + $0x3c] sm:$0xff]
    %v659 = vld [vmem:[%s3 + $0x44] sm:$0xf]
    %v660 = vld [vmem:[%s3 + $0x48] sm:$0xff]
    %v661 = vld [vmem:[%s3 + $0x50] sm:$0xf]
    %v662 = vld [vmem:[%s3 + $0x54] sm:$0xff]
    %v663 = vld [vmem:[%s3 + $0x5c] sm:$0xf]
    %v680 = vunpack.c.l.b16 %v648
    %v681 = vunpack.c.h.b16 %v648
    %v682 = vunpack.c.l.b16 %v649
    %v683 = vunpack.c.l.b16 %v650
    %v684 = vunpack.c.h.b16 %v650
    %v685 = vunpack.c.l.b16 %v651
    %v686 = vunpack.c.l.b16 %v652
    %v687 = vunpack.c.h.b16 %v652
    %v688 = vunpack.c.l.b16 %v653
    %v689 = vunpack.c.l.b16 %v654
    %v690 = vunpack.c.h.b16 %v654
    %v691 = vunpack.c.l.b16 %v655
    %v692 = vunpack.c.l.b16 %v656
    %v693 = vunpack.c.h.b16 %v656
    %v694 = vunpack.c.l.b16 %v657
    %v695 = vunpack.c.l.b16 %v658
    %v696 = vunpack.c.h.b16 %v658
    %v697 = vunpack.c.l.b16 %v659
    %v698 = vunpack.c.l.b16 %v660
    %v699 = vunpack.c.h.b16 %v660
    %v700 = vunpack.c.l.b16 %v661
    %v701 = vunpack.c.l.b16 %v662
    %v702 = vunpack.c.h.b16 %v662
    %v703 = vunpack.c.l.b16 %v663
    %v704 = vpack.c.b16 %v683, %v680
    %v705 = vpack.c.b16 %v684, %v681
    %v706 = vpack.c.b16 %v685, %v682
    %v707 = vpack.c.b16 %v689, %v686
    %v708 = vpack.c.b16 %v690, %v687
    %v709 = vpack.c.b16 %v691, %v688
    %v710 = vpack.c.b16 %v695, %v692
    %v711 = vpack.c.b16 %v696, %v693
    %v712 = vpack.c.b16 %v697, %v694
    %v713 = vpack.c.b16 %v701, %v698
    %v714 = vpack.c.b16 %v702, %v699
    %v715 = vpack.c.b16 %v703, %v700
    %vm724 = vcmask 523264
    %v726 = vsel %vm724, %v706, 0
    %v729 = vsel %vm724, %v709, 0
    %v732 = vsel %vm724, %v712, 0
    %v735 = vsel %vm724, %v715, 0
    %737 = vmatprep.subr.bf16.mxu0 0
    %738 = vmatpush1.bf16.msra.mxu0 %v628
    %739 = vmatprep.subr.bf16.mxu0 0
    %740 = vmatpush1.bf16.msra.mxu0 %v629
    %741 = vmatprep.subr.bf16.mxu0 0
    %742 = vmatpush1.bf16.msra.mxu0 %v630
    %743 = vmatprep.subr.bf16.mxu0 0
    %744 = vmatpush1.bf16.msra.mxu0 %v631
    %745 = vmatprep.subr.bf16.mxu0 0
    %746 = vmatpush1.bf16.msra.mxu0 %v632
    %747 = vmatprep.subr.bf16.mxu0 0
    %748 = vmatpush1.bf16.msra.mxu0 %v633
    %749 = vmatprep.subr.bf16.mxu0 0
    %750 = vmatpush1.bf16.msra.mxu0 %v634
    %751 = vmatprep.subr.bf16.mxu0 0
    %752 = vmatpush1.bf16.msra.mxu0 %v635
    %753 = vmatprep.subr.bf16.mxu0 0
    %754 = vmatpush1.bf16.msra.mxu0 %v636
    %755 = vmatprep.subr.bf16.mxu0 0
    %756 = vmatpush1.bf16.msra.mxu0 %v637
    %757 = vmatprep.subr.bf16.mxu0 0
    %758 = vmatpush1.bf16.msra.mxu0 %v638
    %759 = vmatprep.subr.bf16.mxu0 0
    %760 = vmatpush1.bf16.msra.mxu0 %v639
    %761 = vmatprep.subr.bf16.mxu0 0
    %762 = vmatpush1.bf16.msra.mxu0 %v640
    %763 = vmatprep.subr.bf16.mxu0 0
    %764 = vmatpush1.bf16.msra.mxu0 %v641
    %765 = vmatprep.subr.bf16.mxu0 0
    %766 = vmatpush1.bf16.msra.mxu0 %v642
    %767 = vmatprep.subr.bf16.mxu0 0
    %768 = vmatpush1.bf16.msra.mxu0 %v643
    %769 = vmatprep.mubr.bf16.mxu0 %v705
    %770 = vmatmul.mubr.bf16.gmra.mrb[0].mxu0 %v704
    %v771 = vpop.f32.mrb[0].mxu0
    %v772 = vadd.f32 0.0, %v771
    %v773 = vpop.f32.mrb[0].mxu0
    %v774 = vpop.f32.mrb[0].mxu0
    %v775 = vadd.f32 0.0, %v774
    %v776 = vpop.f32.mrb[0].mxu0
    %777 = vmatprep.mubr.bf16.mxu0 %v708
    %778 = vmatmul.mubr.bf16.gmra.mrb[0].mxu0 %v707
    %v779 = vpop.f32.mrb[0].mxu0
    %v780 = vadd.f32 0.0, %v779
    %v781 = vpop.f32.mrb[0].mxu0
    %v782 = vpop.f32.mrb[0].mxu0
    %v783 = vadd.f32 0.0, %v782
    %v784 = vpop.f32.mrb[0].mxu0
    %785 = vmatprep.mubr.bf16.mxu0 %v711
    %786 = vmatmul.mubr.bf16.gmra.mrb[0].mxu0 %v710
    %v787 = vpop.f32.mrb[0].mxu0
    %v788 = vadd.f32 0.0, %v787
    %v789 = vpop.f32.mrb[0].mxu0
    %v790 = vpop.f32.mrb[0].mxu0
    %v791 = vadd.f32 0.0, %v790
    %v792 = vpop.f32.mrb[0].mxu0
    %793 = vmatprep.mubr.bf16.mxu0 %v714
    %794 = vmatmul.mubr.bf16.gmra.mrb[0].mxu0 %v713
    %v795 = vpop.f32.mrb[0].mxu0
    %v796 = vadd.f32 0.0, %v795
    %v797 = vpop.f32.mrb[0].mxu0
    %v798 = vpop.f32.mrb[0].mxu0
    %v799 = vadd.f32 0.0, %v798
    %v800 = vpop.f32.mrb[0].mxu0
    %801 = vdwg.mxu0
    %802 = vmatprep.subr.bf16.mxu0 0
    %803 = vmatpush1.bf16.msra.mxu0 %v644
    %804 = vmatprep.subr.bf16.mxu0 0
    %805 = vmatpush1.bf16.msra.mxu0 %v645
    %806 = vmatprep.subr.bf16.mxu0 0
    %807 = vmatpush1.bf16.msra.mxu0 %v646
    %808 = vmatprep.subr.bf16.mxu0 0
    %809 = vmatpush1.bf16.msra.mxu0 %v647
    %810 = vmatprep.subr.bf16.mxu0 0
    %811 = vmatpush1.bf16.msra.mxu0 0
    %812 = vmatprep.subr.bf16.mxu0 0
    %813 = vmatpush1.bf16.msra.mxu0 0
    %814 = vmatprep.subr.bf16.mxu0 0
    %815 = vmatpush1.bf16.msra.mxu0 0
    %816 = vmatprep.subr.bf16.mxu0 0
    %817 = vmatpush1.bf16.msra.mxu0 0
    %818 = vmatprep.subr.bf16.mxu0 0
    %819 = vmatpush1.bf16.msra.mxu0 0
    %820 = vmatprep.subr.bf16.mxu0 0
    %821 = vmatpush1.bf16.msra.mxu0 0
    %822 = vmatprep.subr.bf16.mxu0 0
    %823 = vmatpush1.bf16.msra.mxu0 0
    %824 = vmatprep.subr.bf16.mxu0 0
    %825 = vmatpush1.bf16.msra.mxu0 0
    %826 = vmatprep.subr.bf16.mxu0 0
    %827 = vmatpush1.bf16.msra.mxu0 0
    %828 = vmatprep.subr.bf16.mxu0 0
    %829 = vmatpush1.bf16.msra.mxu0 0
    %830 = vmatprep.subr.bf16.mxu0 0
    %831 = vmatpush1.bf16.msra.mxu0 0
    %832 = vmatprep.subr.bf16.mxu0 0
    %833 = vmatpush1.bf16.msra.mxu0 0
    %834 = vmatprep.mubr.bf16.mxu0 0
    %835 = vmatmul.mubr.bf16.gmra.mrb[0].mxu0 %v726
    %v836 = vpop.f32.mrb[0].mxu0
    %v837 = vadd.f32 %v772, %v836
    %v838 = vpop.f32.mrb[0].mxu0
    %v839 = vpop.f32.mrb[0].mxu0
    %v840 = vadd.f32 %v775, %v839
    %v841 = vpop.f32.mrb[0].mxu0
    %842 = vmatprep.mubr.bf16.mxu0 0
    %843 = vmatmul.mubr.bf16.gmra.mrb[0].mxu0 %v729
    %v844 = vpop.f32.mrb[0].mxu0
    %v845 = vadd.f32 %v780, %v844
    %v846 = vpop.f32.mrb[0].mxu0
    %v847 = vpop.f32.mrb[0].mxu0
    %v848 = vadd.f32 %v783, %v847
    %v849 = vpop.f32.mrb[0].mxu0
    %850 = vmatprep.mubr.bf16.mxu0 0
    %851 = vmatmul.mubr.bf16.gmra.mrb[0].mxu0 %v732
    %v852 = vpop.f32.mrb[0].mxu0
    %v853 = vadd.f32 %v788, %v852
    %v854 = vpop.f32.mrb[0].mxu0
    %v855 = vpop.f32.mrb[0].mxu0
    %v856 = vadd.f32 %v791, %v855
    %v857 = vpop.f32.mrb[0].mxu0
    %858 = vmatprep.mubr.bf16.mxu0 0
    %859 = vmatmul.mubr.bf16.gmra.mrb[0].mxu0 %v735
    %v860 = vpop.f32.mrb[0].mxu0
    %v861 = vadd.f32 %v796, %v860
    %v862 = vpop.f32.mrb[0].mxu0
    %v863 = vpop.f32.mrb[0].mxu0
    %v864 = vadd.f32 %v799, %v863
    %v865 = vpop.f32.mrb[0].mxu0
    %866 = vdwg.mxu0
    %v867 = vpack.c.bf16 %v840, %v837
    %v868 = vpack.c.bf16 %v848, %v845
    %v869 = vpack.c.bf16 %v856, %v853
    %v870 = vpack.c.bf16 %v864, %v861
    %v871 = vld [vmem:[%s4] sm:$0xff]
    %v872 = vld [vmem:[%s4 + $0x8] sm:$0xff]
    %v873 = vld [vmem:[%s4 + $0x10] sm:$0xff]
    %v874 = vld [vmem:[%s4 + $0x18] sm:$0xff]
    %v875 = vld [vmem:[%s4 + $0x20] sm:$0xff]
    %v876 = vld [vmem:[%s4 + $0x28] sm:$0xff]
    %v877 = vld [vmem:[%s4 + $0x30] sm:$0xff]
    %v878 = vld [vmem:[%s4 + $0x38] sm:$0xff]
    %v879 = vpack.c.bf16 %v872, %v871
    %v880 = vpack.c.bf16 %v874, %v873
    %v881 = vpack.c.bf16 %v876, %v875
    %v882 = vpack.c.bf16 %v878, %v877
    %884 = vset.pattern.permute.xlu0 0
    %885 = vperm.xlu0 %884, %v879
    %v886 = vpop.permute.xlu0 %885
    %889 = vset.pattern.permute.xlu0 0
    %890 = vperm.xlu0 %889, %v880
    %v891 = vpop.permute.xlu0 %890
    %894 = vset.pattern.permute.xlu0 0
    %895 = vperm.xlu0 %894, %v881
    %v896 = vpop.permute.xlu0 %895
    %899 = vset.pattern.permute.xlu0 0
    %900 = vperm.xlu0 %899, %v882
    %v901 = vpop.permute.xlu0 %900
    %v903 = vadd.bf16 %v867, %v886
    %v904 = vadd.bf16 %v868, %v891
    %v905 = vadd.bf16 %v869, %v896
    %v906 = vadd.bf16 %v870, %v901
    %v907 = vmax.bf16 %v903, 0
    %v908 = vmax.bf16 %v904, 0
    %v909 = vmax.bf16 %v905, 0
    %v910 = vmax.bf16 %v906, 0
    %v911 = vld [vmem:[%s5] sm:$0xff]
    %v912 = vld [vmem:[%s5 + $0x8] sm:$0xff]
    %v913 = vld [vmem:[%s5 + $0x10] sm:$0xff]
    %v914 = vld [vmem:[%s5 + $0x18] sm:$0xff]
    %v915 = vld [vmem:[%s5 + $0x20] sm:$0xff]
    %v916 = vld [vmem:[%s5 + $0x28] sm:$0xff]
    %v917 = vld [vmem:[%s5 + $0x30] sm:$0xff]
    %v918 = vld [vmem:[%s5 + $0x38] sm:$0xff]
    %v919 = vunpack.c.l.bf16 %v907
    %v920 = vunpack.c.h.bf16 %v907
    %v921 = vunpack.c.l.bf16 %v908
    %v922 = vunpack.c.h.bf16 %v908
    %v923 = vunpack.c.l.bf16 %v909
    %v924 = vunpack.c.h.bf16 %v909
    %v925 = vunpack.c.l.bf16 %v910
    %v926 = vunpack.c.h.bf16 %v910
    %928 = vset.pattern.permute.xlu0 0
    %929 = vperm.xlu0 %928, %v911
    %v930 = vpop.permute.xlu0 %929
    %933 = vset.pattern.permute.xlu0 0
    %934 = vperm.xlu0 %933, %v912
    %v935 = vpop.permute.xlu0 %934
    %938 = vset.pattern.permute.xlu0 0
    %939 = vperm.xlu0 %938, %v913
    %v940 = vpop.permute.xlu0 %939
    %943 = vset.pattern.permute.xlu0 0
    %944 = vperm.xlu0 %943, %v914
    %v945 = vpop.permute.xlu0 %944
    %948 = vset.pattern.permute.xlu0 0
    %949 = vperm.xlu0 %948, %v915
    %v950 = vpop.permute.xlu0 %949
    %953 = vset.pattern.permute.xlu0 0
    %954 = vperm.xlu0 %953, %v916
    %v955 = vpop.permute.xlu0 %954
    %958 = vset.pattern.permute.xlu0 0
    %959 = vperm.xlu0 %958, %v917
    %v960 = vpop.permute.xlu0 %959
    %963 = vset.pattern.permute.xlu0 0
    %964 = vperm.xlu0 %963, %v918
    %v965 = vpop.permute.xlu0 %964
    %v967 = vmul.f32 %v930, %v919
    %v968 = vmul.f32 %v935, %v920
    %v969 = vmul.f32 %v940, %v921
    %v970 = vmul.f32 %v945, %v922
    %v971 = vmul.f32 %v950, %v923
    %v972 = vmul.f32 %v955, %v924
    %v973 = vmul.f32 %v960, %v925
    %v974 = vmul.f32 %v965, %v926
    %vm975 = vcmask 64512
    %v976 = vsel %vm975, %v967, 0.0
    %v977 = vsel %vm975, %v968, 0.0
    %v978 = vadd.f32 %v976, %v977
    %v979 = vsel %vm975, %v969, 0.0
    %v980 = vadd.f32 %v978, %v979
    %v981 = vsel %vm975, %v970, 0.0
    %v982 = vadd.f32 %v980, %v981
    %v983 = vsel %vm975, %v971, 0.0
    %v984 = vadd.f32 %v982, %v983
    %v985 = vsel %vm975, %v972, 0.0
    %v986 = vadd.f32 %v984, %v985
    %v987 = vsel %vm975, %v973, 0.0
    %v988 = vadd.f32 %v986, %v987
    %v989 = vsel %vm975, %v974, 0.0
    %v990 = vadd.f32 %v988, %v989
    %v991 = vrot.slane %v990, 4
    %v992 = vadd.f32 %v990, %v991
    %v993 = vrot.slane %v992, 2
    %v994 = vadd.f32 %v992, %v993
    %v995 = vrot.slane %v994, 1
    %v996 = vadd.f32 %v994, %v995
    %s997 = sld [smem:[#allocation2]]
    %v998 = vstv %s997
    %v999 = vadd.f32 %v996, %v998
    %v1000 = vsub.f32 0.0, %v999
    %v1001 = vmul.f32 %v1000, 1.442695
    %v1002 = vpow.pop %v1001
    %v1003 = vadd.f32 %v1002, 1.0
    %v1004 = vrcp.pop %v1003
    %vm1005 = vcmask 57344
    %1006 = vst.msk [vmem:[#allocation3] sm:$0x1] %vm1005, %v1004
    // Predicated region
    $region30: #{simple_model_forward.1} parent=1 // pred_check
      _
    $region31: #{simple_model_forward.1} parent=1 // pred_check_branch
      %1008 = sbr.rel (0) target = $region33
    $region32: #{simple_model_forward.1} parent=1 // pred_region
      %s1010 = ssub.s32 16, 16
      %1011 = vsyncadd [#allocation4], %s1010
      %s1013 = sshll.u32 [#allocation3], 4
      %s1014 = int_to_ptr.vmem [resolvable:$true] %s1013
      %1016 = dma.vmem_to_hbm [thread:$0]  %s1014, 16, %s7, [#allocation4]
    $region33: #{simple_model_forward.1} parent=1 // pred_fallthru
      _
    // Predicated region
    $region34: #{simple_model_forward.1} parent=1 // pred_check
      _
    $region35: #{simple_model_forward.1} parent=1 // pred_check_branch
      %1018 = sbr.rel (0) target = $region37
    $region36: #{simple_model_forward.1} parent=1 // pred_region
      %1019 = dma.done [#allocation4], 16
    $region37: #{simple_model_forward.1} parent=1 // pred_fallthru
      _
    %1020 = vsyncpa [#allocation4], 1

</llo_original>
